<compile_context>
chip_gen: v7x
topology: tpu7x:2x2x1
jax: 0.10.0
libtpu: 0.0.40
codegen_flags: <defaults>
</compile_context>

<pallas_src>
import functools

import jax
import jax.numpy as jnp
from jax.experimental import pallas as pl
from jax.experimental.pallas import tpu as pltpu

# ----------------------------- config -----------------------------
B = 2             # batch
T = 9             # sequence length (forward sees T-1 positions)
V = 128           # vocab size (lane-friendly: multiple of 128)
H = 32            # hidden size
MAX_SEQ_LEN = 16
IGNORE_INDEX = 0
PAD_VALUE = 0


# --------------------------- Pallas kernel ---------------------------
def _fused_loss_kernel(idx_ref, table_ref, loss_ref, *, tq, vocab):
    """Packed (xi|xo) indices + fused [2V, V] table ->
    one combined one-hot K=2V MXU matmul -> masked-mean cross-entropy,
    reduced to a single SMEM scalar."""
    n = idx_ref.shape[0]
    k = table_ref.shape[0]          # = 2 * vocab (tok rows | padded pos rows)

    idx = idx_ref[...]              # [N, 2] i32
    tok = idx[:, 0:1]               # [N, 1] input token ids
    tgt = idx[:, 1:2]               # [N, 1] target token ids

    # --- positions computed in-kernel (no pos operand / host tile+pad) ---
    row = jax.lax.broadcasted_iota(jnp.int32, (n, 1), 0)
    if tq & (tq - 1) == 0:          # tq is static; power of two -> cheap mask
        pos = row & (tq - 1)
    else:
        pos = row % tq

    # --- combined one-hot: cols [0, V) select tok row, cols [V, 2V) pos ---
    col = jax.lax.broadcasted_iota(jnp.int32, (n, k), 1)
    onehot = jnp.logical_or(col == tok, col == pos + vocab).astype(jnp.bfloat16)

    # --- single MXU matmul, K=2V=256, f32 accumulate (exact 2-term sum) ---
    logits = jnp.dot(onehot, table_ref[...],
                     preferred_element_type=jnp.float32)        # [N, V] f32

    # --- stable cross-entropy; max cancels between lse and target logit ---
    col_v = jax.lax.broadcasted_iota(jnp.int32, (n, vocab), 1)
    m = jnp.max(logits, axis=-1, keepdims=True)                 # [N, 1]
    z = logits - m
    sum_e = jnp.sum(jnp.exp(z), axis=-1, keepdims=True)         # [N, 1]
    tgt_z = jnp.sum(jnp.where(col_v == tgt, z, 0.0),
                    axis=-1, keepdims=True)                     # [N, 1]
    nll = jnp.log(sum_e) - tgt_z                                # [N, 1]

    valid = (tgt != IGNORE_INDEX).astype(jnp.float32)           # [N, 1]
    total_nll = jnp.sum(nll * valid)
    total_cnt = jnp.maximum(jnp.sum(valid), 1.0)                # NaN guard
    loss_ref[0] = total_nll / total_cnt


def _fused_forward(idx, fused_table, *, tq):
    """Two VMEM operands, single grid-less invocation, scalar SMEM output."""
    n = idx.shape[0]
    k, vocab = fused_table.shape
    flops = 2 * n * k * vocab
    bytes_accessed = idx.size * 4 + fused_table.size * 2 + 4
    return pl.pallas_call(
        functools.partial(_fused_loss_kernel, tq=tq, vocab=vocab),
        out_shape=jax.ShapeDtypeStruct((1,), jnp.float32),
        in_specs=[pl.BlockSpec(memory_space=pltpu.MemorySpace.VMEM),
                  pl.BlockSpec(memory_space=pltpu.MemorySpace.VMEM)],
        out_specs=pl.BlockSpec(memory_space=pltpu.MemorySpace.SMEM),
        cost_estimate=pl.CostEstimate(
            flops=flops,
            transcendentals=n * vocab + n,
            bytes_accessed=bytes_accessed),
    )(idx, fused_table)


# --------------------------- params / wrapper ---------------------------
def init_params(key):
    k1, k2, k3, k4 = jax.random.split(key, 4)
    tok_emb = jax.random.normal(k1, (V, H), jnp.float32) * 0.02
    pos_emb = jax.random.normal(k2, (MAX_SEQ_LEN, H), jnp.float32) * 0.02
    w_out = jax.random.normal(k3, (H, V), jnp.float32) * 0.02
    b_out = jax.random.normal(k4, (V,), jnp.float32) * 0.02

    # Fold the purely-linear net ONCE (perf feedback): logits(x, p) =
    #   (tok_emb[x] @ W + b) + (pos_emb[p] @ W)
    fused_tok = tok_emb @ w_out + b_out[None, :]                 # [V, V]
    fused_pos = pos_emb @ w_out                                  # [P, V]
    fused_pos = jnp.pad(fused_pos, ((0, V - MAX_SEQ_LEN), (0, 0)))
    fused_table = jnp.concatenate([fused_tok, fused_pos],
                                  axis=0).astype(jnp.bfloat16)   # [2V, V] bf16

    return dict(tok_emb=tok_emb, pos_emb=pos_emb, w_out=w_out, b_out=b_out,
                fused_table=fused_table)


def autoregressive_wrapper_forward(params, x):
    """x: [B, T] int32 tokens. Returns scalar cross-entropy loss (f32),
    matching AutoregressiveWrapper.forward with ignore_index=0."""
    xi = x[:, :-1]                                   # [B, T-1]
    xo = x[:, 1:]                                    # [B, T-1]
    bq, tq = xi.shape
    n = bq * tq
    n_pad = max(((n + 7) // 8) * 8, 8)               # sublane-friendly rows

    # single packed index operand: col 0 = input token, col 1 = target token
    idx = jnp.stack([xi.reshape(-1), xo.reshape(-1)], axis=-1).astype(jnp.int32)
    if n_pad != n:
        # padded rows: token=PAD_VALUE (valid row), target=IGNORE_INDEX (masked)
        idx = jnp.pad(idx, ((0, n_pad - n), (0, 0)),
                      constant_values=IGNORE_INDEX)

    loss = _fused_forward(idx, params["fused_table"], tq=tq)
    return loss[0]


# --------------------------- reference (pure JAX) ---------------------------
def reference_forward(params, x):
    """Independent implementation of the same net/loss numerics (gather +
    logsumexp) for correctness checking."""
    xi = x[:, :-1]
    xo = x[:, 1:]
    tq = xi.shape[1]
    table = params["fused_table"]                                # [2V, V] bf16
    tok_rows = jnp.take(table[:V], xi, axis=0).astype(jnp.float32)   # [B,tq,V]
    pos_rows = table[V:V + tq].astype(jnp.float32)[None, :, :]       # [1,tq,V]
    logits = tok_rows + pos_rows
    lse = jax.scipy.special.logsumexp(logits, axis=-1)
    tgt_logit = jnp.take_along_axis(logits, xo[..., None], axis=-1)[..., 0]
    nll = lse - tgt_logit
    valid = (xo != IGNORE_INDEX).astype(jnp.float32)
    return jnp.sum(nll * valid) / jnp.maximum(jnp.sum(valid), 1.0)


# --------------------------------- main ---------------------------------
if __name__ == "__main__":
    key = jax.random.PRNGKey(0)
    pkey, xkey = jax.random.split(key)
    params = init_params(pkey)

    # tokens in [0, V); a few will hit the ignore_index=0 path
    x = jax.random.randint(xkey, (B, T), 0, V, dtype=jnp.int32)

    loss = autoregressive_wrapper_forward(params, x)
    loss = jax.block_until_ready(loss)

    ref = jax.block_until_ready(reference_forward(params, x))
    assert jnp.isfinite(loss), "loss is not finite"
    assert jnp.allclose(loss, ref, rtol=1e-4, atol=1e-4), (loss, ref)

    print("KERNEL_OK")
</pallas_src>

<mosaic_0001>
module attributes {stable_mosaic.version = 11 : i64} {
  func.func @_fused_loss_kernel(%arg0: memref<16x2xi32, #tpu.memory_space<vmem>>, %arg1: memref<256x128xbf16, #tpu.memory_space<vmem>>, %arg2: memref<1xf32, #tpu.memory_space<smem>>) attributes {dimension_semantics = [], scalar_prefetch = 0 : i64, scratch_operands = 0 : i64, tpu.core_type = #tpu.core_type<tc>} {
    %c0 = arith.constant 0 : index
    %c0_0 = arith.constant 0 : index
    %0 = vector.load %arg0[%c0, %c0_0] : memref<16x2xi32, #tpu.memory_space<vmem>>, vector<16x2xi32>
    %1 = vector.extract_strided_slice %0 {offsets = [0, 0], sizes = [16, 1], strides = [1, 1]} : vector<16x2xi32> to vector<16x1xi32>
    %2 = vector.extract_strided_slice %0 {offsets = [0, 1], sizes = [16, 1], strides = [1, 1]} : vector<16x2xi32> to vector<16x1xi32>
    %3 = tpu.iota {dimensions = array<i32: 0>} : vector<16x1xi32>
    %c7_i32 = arith.constant 7 : i32
    %4 = vector.broadcast %c7_i32 : i32 to vector<16x1xi32>
    %5 = arith.andi %3, %4 : vector<16x1xi32>
    %6 = tpu.iota {dimensions = array<i32: 1>} : vector<16x256xi32>
    %7 = vector.broadcast %1 : vector<16x1xi32> to vector<16x256xi32>
    %8 = arith.cmpi eq, %6, %7 : vector<16x256xi32>
    %c128_i32 = arith.constant 128 : i32
    %9 = vector.broadcast %c128_i32 : i32 to vector<16x1xi32>
    %10 = arith.addi %5, %9 : vector<16x1xi32>
    %11 = vector.broadcast %10 : vector<16x1xi32> to vector<16x256xi32>
    %12 = arith.cmpi eq, %6, %11 : vector<16x256xi32>
    %13 = arith.ori %8, %12 : vector<16x256xi1>
    %14 = arith.extui %13 : vector<16x256xi1> to vector<16x256xi32>
    %15 = arith.sitofp %14 : vector<16x256xi32> to vector<16x256xf32>
    %16 = arith.truncf %15 : vector<16x256xf32> to vector<16x256xbf16>
    %c0_1 = arith.constant 0 : index
    %c0_2 = arith.constant 0 : index
    %17 = vector.load %arg1[%c0_1, %c0_2] : memref<256x128xbf16, #tpu.memory_space<vmem>>, vector<256x128xbf16>
    %cst = arith.constant dense<0.000000e+00> : vector<16x128xf32>
    %18 = tpu.matmul %16, %17, %cst {dimension_numbers = #tpu.dot_dimension_numbers<[1], [0], [0], [1], [0, 0, 1, 1], [], []>} : vector<16x256xbf16>, vector<256x128xbf16>, vector<16x128xf32> -> vector<16x128xf32>
    %19 = tpu.iota {dimensions = array<i32: 1>} : vector<16x128xi32>
    %cst_3 = arith.constant dense<0xFF800000> : vector<16xf32>
    %20 = vector.multi_reduction <maximumf>, %18, %cst_3 [1] : vector<16x128xf32> to vector<16xf32>
    %21 = vector.shape_cast %20 : vector<16xf32> to vector<16x1xf32>
    %22 = vector.broadcast %21 : vector<16x1xf32> to vector<16x128xf32>
    %23 = arith.subf %18, %22 : vector<16x128xf32>
    %24 = math.exp %23 : vector<16x128xf32>
    %cst_4 = arith.constant dense<0.000000e+00> : vector<16xf32>
    %25 = vector.multi_reduction <add>, %24, %cst_4 [1] : vector<16x128xf32> to vector<16xf32>
    %26 = vector.shape_cast %25 : vector<16xf32> to vector<16x1xf32>
    %27 = vector.broadcast %2 : vector<16x1xi32> to vector<16x128xi32>
    %28 = arith.cmpi eq, %19, %27 : vector<16x128xi32>
    %cst_5 = arith.constant 0.000000e+00 : f32
    %29 = vector.broadcast %cst_5 : f32 to vector<16x128xf32>
    %30 = arith.select %28, %23, %29 : vector<16x128xi1>, vector<16x128xf32>
    %cst_6 = arith.constant dense<0.000000e+00> : vector<16xf32>
    %31 = vector.multi_reduction <add>, %30, %cst_6 [1] : vector<16x128xf32> to vector<16xf32>
    %32 = vector.shape_cast %31 : vector<16xf32> to vector<16x1xf32>
    %33 = math.log %26 : vector<16x1xf32>
    %34 = arith.subf %33, %32 : vector<16x1xf32>
    %c0_i32 = arith.constant 0 : i32
    %35 = vector.broadcast %c0_i32 : i32 to vector<16x1xi32>
    %36 = arith.cmpi ne, %2, %35 : vector<16x1xi32>
    %37 = arith.extui %36 : vector<16x1xi1> to vector<16x1xi32>
    %38 = arith.sitofp %37 : vector<16x1xi32> to vector<16x1xf32>
    %39 = arith.mulf %34, %38 : vector<16x1xf32>
    %40 = vector.shape_cast %39 : vector<16x1xf32> to vector<1x16x1xf32>
    %cst_7 = arith.constant dense<0.000000e+00> : vector<1xf32>
    %41 = vector.multi_reduction <add>, %40, %cst_7 [1, 2] : vector<1x16x1xf32> to vector<1xf32>
    %42 = vector.shape_cast %41 : vector<1xf32> to vector<1x1x1xf32>
    %43 = vector.extract %42[0, 0, 0] : f32 from vector<1x1x1xf32>
    %44 = vector.shape_cast %38 : vector<16x1xf32> to vector<1x16x1xf32>
    %cst_8 = arith.constant dense<0.000000e+00> : vector<1xf32>
    %45 = vector.multi_reduction <add>, %44, %cst_8 [1, 2] : vector<1x16x1xf32> to vector<1xf32>
    %46 = vector.shape_cast %45 : vector<1xf32> to vector<1x1x1xf32>
    %47 = vector.extract %46[0, 0, 0] : f32 from vector<1x1x1xf32>
    %cst_9 = arith.constant 1.000000e+00 : f32
    %48 = arith.maximumf %47, %cst_9 : f32
    %49 = arith.divf %43, %48 : f32
    %c0_10 = arith.constant 0 : index
    %50 = memref.load %arg2[%c0_10] : memref<1xf32, #tpu.memory_space<smem>>
    memref.store %49, %arg2[%c0_10] : memref<1xf32, #tpu.memory_space<smem>>
    return
  }
}

</mosaic_0001>

<llo_original>
// kernel: tpu_custom_call.1
$region0: #{tpu_custom_call.1}
  #allocation0 [shape = 'u32[]', space=smem, size = 0x4, offset = 0x4, fixed_abs, tag = 'smem constant byte address 0x4 - core index']
  #allocation1 [shape = 'u32[144,128]{1,0:T(1,128)}', space=vmem, size = 0x12000, scoped, tag = 'internal scratch']
  %s0 = inlined_call_operand.vmem [shape: s32[16,2], index: 0, kind: input, shape index: {}]
  %s1 = inlined_call_operand.hbm [shape: bf16[256,128], index: 1, kind: input, shape index: {}]
  %s2 = inlined_call_operand.hbm [shape: f32[1], index: 2, kind: output, shape index: {}]
  %s3 = sld [smem:[#allocation0]]
  $region22: #{tpu_custom_call.1} parent=0
    _
  %s5 = ssub.s32 1, %s3
  %s6 = scalar_select 0, %s5, %s3
  $region1: #{tpu_custom_call.1} parent=0
    #allocation2 [shape = 'u8[65536]{0}', space=vmem, size = 0x10000, scoped, tag = 'input window, operand 1, single buffered']
    #allocation3 [shape = 's32[1]{0}', space=sflag, size = 0x4, scoped, tag = 'scoped memory for tpu_custom_call.1']
    #allocation4 [shape = 's32[1]{0}', space=sflag, size = 0x4, scoped, tag = 'scoped memory for tpu_custom_call.1']
    #allocation5 [shape = 'u8[512]{0}', space=smem, size = 0x200, scoped, tag = 'output window, operand 0, single buffered']
    %7 = vsyncpa [#allocation3], 0
    %8 = vsyncpa [#allocation4], 0
    // Predicated region
    $region2: #{tpu_custom_call.1} parent=1 // pred_check
      _
    $region3: #{tpu_custom_call.1} parent=1 // pred_check_branch
      %10 = sbr.rel (0) target = $region5
    $region4: #{tpu_custom_call.1} parent=1 // pred_region
      _
    $region5: #{tpu_custom_call.1} parent=1 // pred_fallthru
      _
    // Predicated region
    $region6: #{tpu_custom_call.1} parent=1 // pred_check
      _
    $region7: #{tpu_custom_call.1} parent=1 // pred_check_branch
      %12 = sbr.rel (0) target = $region9
    $region8: #{tpu_custom_call.1} parent=1 // pred_region
      %s14 = ssub.s32 2048, 2048
      %15 = vsyncadd [#allocation3], %s14
      %s16 = sshll.u32 [#allocation2], 4
      %s17 = int_to_ptr.vmem [resolvable:$true] %s16
      %22 = dma.hbm_to_vmem [thread:$0]  %s1, 2048, %s17, [#allocation3], 64, 64, 4
    $region9: #{tpu_custom_call.1} parent=1 // pred_fallthru
      _
    // Predicated region
    $region10: #{tpu_custom_call.1} parent=1 // pred_check
      _
    $region11: #{tpu_custom_call.1} parent=1 // pred_check_branch
      %24 = sbr.rel (0) target = $region13
    $region12: #{tpu_custom_call.1} parent=1 // pred_region
      %25 = dma.done [#allocation3], 2048
    $region13: #{tpu_custom_call.1} parent=1 // pred_fallthru
      _
    %v27 = vld [vmem:[%s0] sm:$0xff]
    %v28 = vld [vmem:[%s0 + $0x8] sm:$0xff]
    %v29 = vlaneseq
    %v30 = vshrl.u32 %v29, 7
    %v31 = vadd.s32 %v30, 8
    %v32 = vand.u32 %v30, 7
    %v33 = vand.u32 %v31, 7
    %v34 = vlaneseq
    %v35 = vand.u32 %v34, 127
    %v36 = vadd.s32 %v35, 128
    %37 = vset.pattern.permute.xlu0 0
    %38 = vperm.xlu0 %37, %v27
    %v39 = vpop.permute.xlu0 %38
    %40 = vset.pattern.permute.xlu0 0
    %41 = vperm.xlu0 %40, %v28
    %v42 = vpop.permute.xlu0 %41
    %vm43 = vcmp.eq.s32.totalorder %v35, %v39
    %vm44 = vcmp.eq.s32.totalorder %v36, %v39
    %vm45 = vcmp.eq.s32.totalorder %v35, %v42
    %vm46 = vcmp.eq.s32.totalorder %v36, %v42
    %v47 = vadd.s32 %v32, 128
    %v48 = vadd.s32 %v33, 128
    %vm49 = vcmp.eq.s32.totalorder %v35, %v47
    %vm50 = vcmp.eq.s32.totalorder %v36, %v47
    %vm51 = vcmp.eq.s32.totalorder %v35, %v48
    %vm52 = vcmp.eq.s32.totalorder %v36, %v48
    %vm53 = vmor %vm43, %vm49
    %vm54 = vmor %vm44, %vm50
    %vm55 = vmor %vm45, %vm51
    %vm56 = vmor %vm46, %vm52
    %v57 = vsel %vm53, 1, 0
    %v58 = vsel %vm54, 1, 0
    %v59 = vsel %vm55, 1, 0
    %v60 = vsel %vm56, 1, 0
    %v61 = vcvt.s32.f32 %v57
    %v62 = vcvt.s32.f32 %v58
    %v63 = vcvt.s32.f32 %v59
    %v64 = vcvt.s32.f32 %v60
    %v65 = vpack.c.bf16 %v63, %v61
    %v66 = vpack.c.bf16 %v64, %v62
    %v67 = vld [vmem:[#allocation2] sm:$0xf]
    %v68 = vld [vmem:[#allocation2 + $0x4] sm:$0xf]
    %v69 = vld [vmem:[#allocation2 + $0x8] sm:$0xf]
    %v70 = vld [vmem:[#allocation2 + $0xc] sm:$0xf]
    %v71 = vld [vmem:[#allocation2 + $0x10] sm:$0xf]
    %v72 = vld [vmem:[#allocation2 + $0x14] sm:$0xf]
    %v73 = vld [vmem:[#allocation2 + $0x18] sm:$0xf]
    %v74 = vld [vmem:[#allocation2 + $0x1c] sm:$0xf]
    %v75 = vld [vmem:[#allocation2 + $0x20] sm:$0xf]
    %v76 = vld [vmem:[#allocation2 + $0x24] sm:$0xf]
    %v77 = vld [vmem:[#allocation2 + $0x28] sm:$0xf]
    %v78 = vld [vmem:[#allocation2 + $0x2c] sm:$0xf]
    %v79 = vld [vmem:[#allocation2 + $0x30] sm:$0xf]
    %v80 = vld [vmem:[#allocation2 + $0x34] sm:$0xf]
    %v81 = vld [vmem:[#allocation2 + $0x38] sm:$0xf]
    %v82 = vld [vmem:[#allocation2 + $0x3c] sm:$0xf]
    %v83 = vld [vmem:[#allocation2 + $0x40] sm:$0xf]
    %v84 = vld [vmem:[#allocation2 + $0x44] sm:$0xf]
    %v85 = vld [vmem:[#allocation2 + $0x48] sm:$0xf]
    %v86 = vld [vmem:[#allocation2 + $0x4c] sm:$0xf]
    %v87 = vld [vmem:[#allocation2 + $0x50] sm:$0xf]
    %v88 = vld [vmem:[#allocation2 + $0x54] sm:$0xf]
    %v89 = vld [vmem:[#allocation2 + $0x58] sm:$0xf]
    %v90 = vld [vmem:[#allocation2 + $0x5c] sm:$0xf]
    %v91 = vld [vmem:[#allocation2 + $0x60] sm:$0xf]
    %v92 = vld [vmem:[#allocation2 + $0x64] sm:$0xf]
    %v93 = vld [vmem:[#allocation2 + $0x68] sm:$0xf]
    %v94 = vld [vmem:[#allocation2 + $0x6c] sm:$0xf]
    %v95 = vld [vmem:[#allocation2 + $0x70] sm:$0xf]
    %v96 = vld [vmem:[#allocation2 + $0x74] sm:$0xf]
    %v97 = vld [vmem:[#allocation2 + $0x78] sm:$0xf]
    %v98 = vld [vmem:[#allocation2 + $0x7c] sm:$0xf]
    %v131 = vunpack.c.l.b16 %v67
    %v132 = vunpack.c.l.b16 %v68
    %v133 = vunpack.c.l.b16 %v69
    %v134 = vunpack.c.l.b16 %v70
    %v135 = vunpack.c.l.b16 %v71
    %v136 = vunpack.c.l.b16 %v72
    %v137 = vunpack.c.l.b16 %v73
    %v138 = vunpack.c.l.b16 %v74
    %v139 = vunpack.c.l.b16 %v75
    %v140 = vunpack.c.l.b16 %v76
    %v141 = vunpack.c.l.b16 %v77
    %v142 = vunpack.c.l.b16 %v78
    %v143 = vunpack.c.l.b16 %v79
    %v144 = vunpack.c.l.b16 %v80
    %v145 = vunpack.c.l.b16 %v81
    %v146 = vunpack.c.l.b16 %v82
    %v147 = vunpack.c.l.b16 %v83
    %v148 = vunpack.c.l.b16 %v84
    %v149 = vunpack.c.l.b16 %v85
    %v150 = vunpack.c.l.b16 %v86
    %v151 = vunpack.c.l.b16 %v87
    %v152 = vunpack.c.l.b16 %v88
    %v153 = vunpack.c.l.b16 %v89
    %v154 = vunpack.c.l.b16 %v90
    %v155 = vunpack.c.l.b16 %v91
    %v156 = vunpack.c.l.b16 %v92
    %v157 = vunpack.c.l.b16 %v93
    %v158 = vunpack.c.l.b16 %v94
    %v159 = vunpack.c.l.b16 %v95
    %v160 = vunpack.c.l.b16 %v96
    %v161 = vunpack.c.l.b16 %v97
    %v162 = vunpack.c.l.b16 %v98
    %v163 = vpack.c.b16 %v132, %v131
    %v164 = vpack.c.b16 %v134, %v133
    %v165 = vpack.c.b16 %v136, %v135
    %v166 = vpack.c.b16 %v138, %v137
    %v167 = vpack.c.b16 %v140, %v139
    %v168 = vpack.c.b16 %v142, %v141
    %v169 = vpack.c.b16 %v144, %v143
    %v170 = vpack.c.b16 %v146, %v145
    %v171 = vpack.c.b16 %v148, %v147
    %v172 = vpack.c.b16 %v150, %v149
    %v173 = vpack.c.b16 %v152, %v151
    %v174 = vpack.c.b16 %v154, %v153
    %v175 = vpack.c.b16 %v156, %v155
    %v176 = vpack.c.b16 %v158, %v157
    %v177 = vpack.c.b16 %v160, %v159
    %v178 = vpack.c.b16 %v162, %v161
    %195 = vmatprep.subr.bf16.mxu0 0
    %196 = vmatpush1.bf16.msra.mxu0 %v163
    %197 = vmatprep.subr.bf16.mxu0 0
    %198 = vmatpush1.bf16.msra.mxu0 %v164
    %199 = vmatprep.subr.bf16.mxu0 0
    %200 = vmatpush1.bf16.msra.mxu0 %v165
    %201 = vmatprep.subr.bf16.mxu0 0
    %202 = vmatpush1.bf16.msra.mxu0 %v166
    %203 = vmatprep.subr.bf16.mxu0 0
    %204 = vmatpush1.bf16.msra.mxu0 %v167
    %205 = vmatprep.subr.bf16.mxu0 0
    %206 = vmatpush1.bf16.msra.mxu0 %v168
    %207 = vmatprep.subr.bf16.mxu0 0
    %208 = vmatpush1.bf16.msra.mxu0 %v169
    %209 = vmatprep.subr.bf16.mxu0 0
    %210 = vmatpush1.bf16.msra.mxu0 %v170
    %211 = vmatprep.subr.bf16.mxu0 0
    %212 = vmatpush1.bf16.msra.mxu0 %v171
    %213 = vmatprep.subr.bf16.mxu0 0
    %214 = vmatpush1.bf16.msra.mxu0 %v172
    %215 = vmatprep.subr.bf16.mxu0 0
    %216 = vmatpush1.bf16.msra.mxu0 %v173
    %217 = vmatprep.subr.bf16.mxu0 0
    %218 = vmatpush1.bf16.msra.mxu0 %v174
    %219 = vmatprep.subr.bf16.mxu0 0
    %220 = vmatpush1.bf16.msra.mxu0 %v175
    %221 = vmatprep.subr.bf16.mxu0 0
    %222 = vmatpush1.bf16.msra.mxu0 %v176
    %223 = vmatprep.subr.bf16.mxu0 0
    %224 = vmatpush1.bf16.msra.mxu0 %v177
    %225 = vmatprep.subr.bf16.mxu0 0
    %226 = vmatpush1.bf16.msra.mxu0 %v178
    %227 = vmatprep.mubr.bf16.mxu0 %v66
    %228 = vmatmul.mubr.bf16.gmra.mrb[0].mxu0 %v65
    %v229 = vpop.f32.mrb[0].mxu0
    %v230 = vadd.f32 0.0, %v229
    %v231 = vpop.f32.mrb[0].mxu0
    %v232 = vpop.f32.mrb[0].mxu0
    %v233 = vadd.f32 0.0, %v232
    %v234 = vpop.f32.mrb[0].mxu0
    %235 = vdwg.mxu0
    %236 = vmax.xlane.f32.xlu0 %v230
    %v237 = vpop.xlane.xlu0 %236
    %238 = vmax.xlane.f32.xlu0 %v233
    %v239 = vpop.xlane.xlu0 %238
    %v240 = vsub.f32 %v230, %v237
    %v241 = vsub.f32 %v233, %v239
    %v242 = vmul.f32 %v240, 1.442695
    %v243 = vpow.pop %v242
    %v244 = vmul.f32 %v241, 1.442695
    %v245 = vpow.pop %v244
    %246 = vadd.xlane.f32.xlu0 %v243
    %v247 = vpop.xlane.xlu0 %246
    %248 = vadd.xlane.f32.xlu0 %v245
    %v249 = vpop.xlane.xlu0 %248
    %250 = vset.pattern.permute.xlu0 1
    %251 = vperm.xlu0 %250, %v27
    %v252 = vpop.permute.xlu0 %251
    %253 = vset.pattern.permute.xlu0 1
    %254 = vperm.xlu0 %253, %v28
    %v255 = vpop.permute.xlu0 %254
    %vm256 = vcmp.eq.s32.totalorder %v35, %v252
    %vm257 = vcmp.eq.s32.totalorder %v35, %v255
    %v258 = vsel %vm256, %v240, 0.0
    %v259 = vsel %vm257, %v241, 0.0
    %260 = vadd.xlane.f32.xlu0 %v258
    %v261 = vpop.xlane.xlu0 %260
    %262 = vadd.xlane.f32.xlu0 %v259
    %v263 = vpop.xlane.xlu0 %262
    %v264 = vlog2.pop %v247
    %v265 = vmul.f32 %v264, 0.6931472
    %v266 = vlog2.pop %v249
    %v267 = vmul.f32 %v266, 0.6931472
    %v268 = vsub.f32 %v265, %v261
    %v269 = vsub.f32 %v267, %v263
    %vm270 = vcmp.ne.s32.totalorder %v27, 0
    %vm271 = vcmp.ne.s32.totalorder %v28, 0
    %v272 = vsel %vm270, 1, 0
    %v273 = vsel %vm271, 1, 0
    %v274 = vcvt.s32.f32 %v272
    %v275 = vcvt.s32.f32 %v273
    %v276 = vmul.f32 %v268, %v274
    %v277 = vmul.f32 %v269, %v275
    %280 = vrot.lane.b32.xlu0 %v276, 127
    %v281 = vpop.permute.xlu0 %280
    %282 = vrot.lane.b32.xlu0 %v277, 127
    %v283 = vpop.permute.xlu0 %282
    %vm286 = vcmask 7168
    %v287 = vsel %vm286, %v281, 0.0
    %v288 = vsel %vm286, %v283, 0.0
    %v289 = vadd.f32 %v287, %v288
    %290 = vadd.xlane.f32.xlu0 %v289
    %v291 = vpop.xlane.xlu0 %290
    %v292 = vrot.slane %v291, 4
    %v293 = vadd.f32 %v291, %v292
    %v294 = vrot.slane %v293, 2
    %v295 = vadd.f32 %v293, %v294
    %v296 = vrot.slane %v295, 1
    %v297 = vadd.f32 %v295, %v296
    %s298 = vtos %v297
    %301 = vrot.lane.b32.xlu0 %v274, 127
    %v302 = vpop.permute.xlu0 %301
    %303 = vrot.lane.b32.xlu0 %v275, 127
    %v304 = vpop.permute.xlu0 %303
    %v307 = vsel %vm286, %v302, 0.0
    %v308 = vsel %vm286, %v304, 0.0
    %v309 = vadd.f32 %v307, %v308
    %310 = vadd.xlane.f32.xlu0 %v309
    %v311 = vpop.xlane.xlu0 %310
    %v312 = vrot.slane %v311, 4
    %v313 = vadd.f32 %v311, %v312
    %v314 = vrot.slane %v313, 2
    %v315 = vadd.f32 %v313, %v314
    %v316 = vrot.slane %v315, 1
    %v317 = vadd.f32 %v315, %v316
    %s318 = vtos %v317
    %s319 = smax.f32 %s318, 1.0
    %v320 = vstv %s319
    %v321 = vrcp.pop %v320
    %s322 = vtos %v321
    %s323 = smul.f32 %s298, %s322
    %s324 = scalar_lea.smem [#allocation5], 0
    %325 = sst [smem:[%s324]] %s323
    // Predicated region
    $region14: #{tpu_custom_call.1} parent=1 // pred_check
      _
    $region15: #{tpu_custom_call.1} parent=1 // pred_check_branch
      %327 = sbr.rel (0) target = $region17
    $region16: #{tpu_custom_call.1} parent=1 // pred_region
      %s329 = ssub.s32 16, 16
      %330 = vsyncadd [#allocation4], %s329
      %333 = dma.smem_to_hbm [#allocation5], 16, %s2, [#allocation4]
    $region17: #{tpu_custom_call.1} parent=1 // pred_fallthru
      _
    // Predicated region
    $region18: #{tpu_custom_call.1} parent=1 // pred_check
      _
    $region19: #{tpu_custom_call.1} parent=1 // pred_check_branch
      %335 = sbr.rel (0) target = $region21
    $region20: #{tpu_custom_call.1} parent=1 // pred_region
      %336 = dma.done [#allocation4], 16
    $region21: #{tpu_custom_call.1} parent=1 // pred_fallthru
      _
    %337 = sfence
    %338 = vsyncpa [#allocation3], 1
    %339 = vsyncpa [#allocation4], 1

</llo_original>
